<compile_context>
chip_gen: v6e
topology: v6e:2x2x1
jax: 0.10.0
libtpu: 0.0.40
codegen_flags: <defaults>
</compile_context>

<pallas_src>
import jax
import jax.numpy as jnp
from jax.experimental import pallas as pl
from jax.experimental.pallas import tpu as pltpu


def _round_up(n, m):
    return ((n + m - 1) // m) * m


def router_q_kernel(
    x_ref,
    w1_ref, b1_ref, g1_ref, be1_ref,
    w2_ref, b2_ref, g2_ref, be2_ref,
    w3_ref, b3_ref,
    out_ref,
):
    eps = 1e-5  # PyTorch LayerNorm default eps

    # ---- fc1: [TB, in] @ [in, 256] + [1, 256]  (bf16 operands, f32 accumulate)
    h = jnp.dot(
        x_ref[...].astype(jnp.bfloat16), w1_ref[...],
        preferred_element_type=jnp.float32,
    ) + b1_ref[...]

    # ---- fused LayerNorm(256) + ReLU (centered variance, folded scale), f32
    mu = jnp.mean(h, axis=-1, keepdims=True)
    d = h - mu
    var = jnp.mean(d * d, axis=-1, keepdims=True)
    h = jnp.maximum(d * (g1_ref[...] * jax.lax.rsqrt(var + eps)) + be1_ref[...], 0.0)

    # ---- fc2: [TB, 256] @ [256, 128] + [1, 128]
    h = jnp.dot(
        h.astype(jnp.bfloat16), w2_ref[...],
        preferred_element_type=jnp.float32,
    ) + b2_ref[...]

    # ---- fused LayerNorm(128) + ReLU
    mu = jnp.mean(h, axis=-1, keepdims=True)
    d = h - mu
    var = jnp.mean(d * d, axis=-1, keepdims=True)
    h = jnp.maximum(d * (g2_ref[...] * jax.lax.rsqrt(var + eps)) + be2_ref[...], 0.0)

    # ---- out: [TB, 128] @ [128, action_dim] + [1, action_dim]
    out_ref[...] = (
        jnp.dot(h.astype(jnp.bfloat16), w3_ref[...],
                preferred_element_type=jnp.float32)
        + b3_ref[...]
    ).astype(out_ref.dtype)


def pack_params(params):
    """One-time parameter packing (call at init, not per forward).

    Casts the three matmul weights to bf16 for the MXU; biases / LayerNorm
    params stay f32. Doing this once removes the per-call weight-prep XLA
    passes from the forward path.
    """
    p = dict(params)
    for k in ("w1", "w2", "w3"):
        p[k] = params[k].astype(jnp.bfloat16)
    return p


def router_q_forward(x, packed, *, tile_b=2048, core_parallel=False):
    """Pallas forward pass of RouterQNetwork.

    x:       [B, input_dim] float32
    packed:  dict from pack_params()
    returns: [B, action_dim] float32
    """
    B, input_dim = x.shape
    action_dim = packed["w3"].shape[1]

    # Batch tile: multiple of 8 (f32 sublane tile), capped so tiny batches
    # don't become one huge mostly-padded block. Ragged batches are handled by
    # pl.cdiv + Pallas boundary masking (no jnp.pad of x, no output slicing).
    tile_b = max(8, min(tile_b, _round_up(B, 8)))
    grid = (pl.cdiv(B, tile_b),)

    def resident(arr):
        # Whole-array block with a constant index_map -> fetched once,
        # stays VMEM-resident across all grid steps.
        return pl.BlockSpec(arr.shape, lambda i: (0, 0))

    in_specs = [
        pl.BlockSpec((tile_b, input_dim), lambda i: (i, 0)),  # streamed x
        resident(packed["w1"]), resident(packed["b1"]),
        resident(packed["g1"]), resident(packed["be1"]),
        resident(packed["w2"]), resident(packed["b2"]),
        resident(packed["g2"]), resident(packed["be2"]),
        resident(packed["w3"]), resident(packed["b3"]),
    ]

    sem = pltpu.CORE_PARALLEL if core_parallel else pltpu.PARALLEL

    return pl.pallas_call(
        router_q_kernel,
        out_shape=jax.ShapeDtypeStruct((B, action_dim), jnp.float32),
        grid=grid,
        in_specs=in_specs,
        out_specs=pl.BlockSpec((tile_b, action_dim), lambda i: (i, 0)),
        compiler_params=pltpu.CompilerParams(
            dimension_semantics=(sem,),
            # Safe on all generations (<= physical VMEM everywhere); gives
            # headroom over v5e's 16 MiB scoped default at large tile_b.
            vmem_limit_bytes=32 * 1024 * 1024,
        ),
    )(x,
      packed["w1"], packed["b1"], packed["g1"], packed["be1"],
      packed["w2"], packed["b2"], packed["g2"], packed["be2"],
      packed["w3"], packed["b3"])


def init_params(key, input_dim, action_dim):
    """Deterministic synthetic parameters matching the PyTorch module shapes."""
    k1, k2, k3, k4, k5, k6 = jax.random.split(key, 6)
    scale = 0.05
    return {
        # fc1: Linear(input_dim, 256)
        "w1": scale * jax.random.normal(k1, (input_dim, 256), jnp.float32),
        "b1": scale * jax.random.normal(k2, (1, 256), jnp.float32),
        # norm1: LayerNorm(256)
        "g1": jnp.ones((1, 256), jnp.float32),
        "be1": jnp.zeros((1, 256), jnp.float32),
        # fc2: Linear(256, 128)
        "w2": scale * jax.random.normal(k3, (256, 128), jnp.float32),
        "b2": scale * jax.random.normal(k4, (1, 128), jnp.float32),
        # norm2: LayerNorm(128)
        "g2": jnp.ones((1, 128), jnp.float32),
        "be2": jnp.zeros((1, 128), jnp.float32),
        # out: Linear(128, action_dim)
        "w3": scale * jax.random.normal(k5, (128, action_dim), jnp.float32),
        "b3": scale * jax.random.normal(k6, (1, action_dim), jnp.float32),
    }


def router_q_ref(x, p):
    """Pure-JAX f32 reference mirroring the PyTorch forward."""
    eps = 1e-5
    h = x @ p["w1"] + p["b1"]
    mu = h.mean(-1, keepdims=True)
    var = ((h - mu) ** 2).mean(-1, keepdims=True)
    h = jnp.maximum((h - mu) / jnp.sqrt(var + eps) * p["g1"] + p["be1"], 0.0)
    h = h @ p["w2"] + p["b2"]
    mu = h.mean(-1, keepdims=True)
    var = ((h - mu) ** 2).mean(-1, keepdims=True)
    h = jnp.maximum((h - mu) / jnp.sqrt(var + eps) * p["g2"] + p["be2"], 0.0)
    return h @ p["w3"] + p["b3"]


if __name__ == "__main__":
    input_dim = 32
    action_dim = 8

    key = jax.random.PRNGKey(0)
    kx, kp, kx2 = jax.random.split(key, 3)
    params = init_params(kp, input_dim, action_dim)
    packed = pack_params(params)  # one-time weight packing (bf16 cast)

    # --- small batch (single grid step) ---
    batch = 8
    x = jax.random.normal(kx, (batch, input_dim), jnp.float32)
    out = jax.block_until_ready(router_q_forward(x, packed))
    ref = router_q_ref(x, params)
    assert out.shape == (batch, action_dim)
    # bf16 MXU operands -> looser tolerance than a pure-f32 comparison.
    assert jnp.allclose(out, ref, atol=2e-2, rtol=2e-2), "mismatch vs reference (small)"

    # --- ragged batch (multiple grid steps, masked final tile) ---
    batch2 = 300
    x2 = jax.random.normal(kx2, (batch2, input_dim), jnp.float32)
    out2 = jax.block_until_ready(router_q_forward(x2, packed, tile_b=128))
    ref2 = router_q_ref(x2, params)
    assert out2.shape == (batch2, action_dim)
    assert jnp.allclose(out2, ref2, atol=2e-2, rtol=2e-2), "mismatch vs reference (ragged)"

    print("KERNEL_OK")
</pallas_src>

<mosaic_0001>
module attributes {stable_mosaic.version = 11 : i64} {
  func.func @router_q_kernel(%arg0: i32, %arg1: memref<8x32xf32, #tpu.memory_space<vmem>>, %arg2: memref<32x256xbf16, #tpu.memory_space<vmem>>, %arg3: memref<1x256xf32, #tpu.memory_space<vmem>>, %arg4: memref<1x256xf32, #tpu.memory_space<vmem>>, %arg5: memref<1x256xf32, #tpu.memory_space<vmem>>, %arg6: memref<256x128xbf16, #tpu.memory_space<vmem>>, %arg7: memref<1x128xf32, #tpu.memory_space<vmem>>, %arg8: memref<1x128xf32, #tpu.memory_space<vmem>>, %arg9: memref<1x128xf32, #tpu.memory_space<vmem>>, %arg10: memref<128x8xbf16, #tpu.memory_space<vmem>>, %arg11: memref<1x8xf32, #tpu.memory_space<vmem>>, %arg12: memref<8x8xf32, #tpu.memory_space<vmem>>) attributes {dimension_semantics = [#tpu.dimension_semantics<parallel>], iteration_bounds = array<i64: 1>, scalar_prefetch = 0 : i64, scratch_operands = 0 : i64, tpu.core_type = #tpu.core_type<tc>, window_params = [{transform_indices = @transform_0, window_bounds = array<i64: 8, 32>}, {pipeline_mode = #tpu.pipeline_mode<synchronous>, transform_indices = @transform_1, window_bounds = array<i64: 32, 256>}, {pipeline_mode = #tpu.pipeline_mode<synchronous>, transform_indices = @transform_2, window_bounds = array<i64: 1, 256>}, {pipeline_mode = #tpu.pipeline_mode<synchronous>, transform_indices = @transform_3, window_bounds = array<i64: 1, 256>}, {pipeline_mode = #tpu.pipeline_mode<synchronous>, transform_indices = @transform_4, window_bounds = array<i64: 1, 256>}, {pipeline_mode = #tpu.pipeline_mode<synchronous>, transform_indices = @transform_5, window_bounds = array<i64: 256, 128>}, {pipeline_mode = #tpu.pipeline_mode<synchronous>, transform_indices = @transform_6, window_bounds = array<i64: 1, 128>}, {pipeline_mode = #tpu.pipeline_mode<synchronous>, transform_indices = @transform_7, window_bounds = array<i64: 1, 128>}, {pipeline_mode = #tpu.pipeline_mode<synchronous>, transform_indices = @transform_8, window_bounds = array<i64: 1, 128>}, {pipeline_mode = #tpu.pipeline_mode<synchronous>, transform_indices = @transform_9, window_bounds = array<i64: 128, 8>}, {pipeline_mode = #tpu.pipeline_mode<synchronous>, transform_indices = @transform_10, window_bounds = array<i64: 1, 8>}, {transform_indices = @transform_11, window_bounds = array<i64: 8, 8>}]} {
    %c0 = arith.constant 0 : index
    %c0_0 = arith.constant 0 : index
    %0 = vector.load %arg1[%c0, %c0_0] : memref<8x32xf32, #tpu.memory_space<vmem>>, vector<8x32xf32>
    %1 = arith.truncf %0 : vector<8x32xf32> to vector<8x32xbf16>
    %c0_1 = arith.constant 0 : index
    %c0_2 = arith.constant 0 : index
    %2 = vector.load %arg2[%c0_1, %c0_2] : memref<32x256xbf16, #tpu.memory_space<vmem>>, vector<32x256xbf16>
    %cst = arith.constant dense<0.000000e+00> : vector<8x256xf32>
    %3 = tpu.matmul %1, %2, %cst {dimension_numbers = #tpu.dot_dimension_numbers<[1], [0], [0], [1], [0, 0, 1, 1], [], []>} : vector<8x32xbf16>, vector<32x256xbf16>, vector<8x256xf32> -> vector<8x256xf32>
    %c0_3 = arith.constant 0 : index
    %c0_4 = arith.constant 0 : index
    %4 = vector.load %arg3[%c0_3, %c0_4] : memref<1x256xf32, #tpu.memory_space<vmem>>, vector<1x256xf32>
    %5 = vector.broadcast %4 : vector<1x256xf32> to vector<8x256xf32>
    %6 = arith.addf %3, %5 : vector<8x256xf32>
    %cst_5 = arith.constant dense<0.000000e+00> : vector<8xf32>
    %7 = vector.multi_reduction <add>, %6, %cst_5 [1] : vector<8x256xf32> to vector<8xf32>
    %8 = vector.shape_cast %7 : vector<8xf32> to vector<8x1xf32>
    %cst_6 = arith.constant 2.560000e+02 : f32
    %9 = vector.broadcast %cst_6 : f32 to vector<8x1xf32>
    %10 = arith.divf %8, %9 : vector<8x1xf32>
    %11 = vector.broadcast %10 : vector<8x1xf32> to vector<8x256xf32>
    %12 = arith.subf %6, %11 : vector<8x256xf32>
    %13 = arith.mulf %12, %12 : vector<8x256xf32>
    %cst_7 = arith.constant dense<0.000000e+00> : vector<8xf32>
    %14 = vector.multi_reduction <add>, %13, %cst_7 [1] : vector<8x256xf32> to vector<8xf32>
    %15 = vector.shape_cast %14 : vector<8xf32> to vector<8x1xf32>
    %cst_8 = arith.constant 2.560000e+02 : f32
    %16 = vector.broadcast %cst_8 : f32 to vector<8x1xf32>
    %17 = arith.divf %15, %16 : vector<8x1xf32>
    %c0_9 = arith.constant 0 : index
    %c0_10 = arith.constant 0 : index
    %18 = vector.load %arg4[%c0_9, %c0_10] : memref<1x256xf32, #tpu.memory_space<vmem>>, vector<1x256xf32>
    %cst_11 = arith.constant 9.99999974E-6 : f32
    %19 = vector.broadcast %cst_11 : f32 to vector<8x1xf32>
    %20 = arith.addf %17, %19 : vector<8x1xf32>
    %21 = math.rsqrt %20 : vector<8x1xf32>
    %22 = vector.broadcast %18 : vector<1x256xf32> to vector<8x256xf32>
    %23 = vector.broadcast %21 : vector<8x1xf32> to vector<8x256xf32>
    %24 = arith.mulf %22, %23 : vector<8x256xf32>
    %25 = arith.mulf %12, %24 : vector<8x256xf32>
    %c0_12 = arith.constant 0 : index
    %c0_13 = arith.constant 0 : index
    %26 = vector.load %arg5[%c0_12, %c0_13] : memref<1x256xf32, #tpu.memory_space<vmem>>, vector<1x256xf32>
    %27 = vector.broadcast %26 : vector<1x256xf32> to vector<8x256xf32>
    %28 = arith.addf %25, %27 : vector<8x256xf32>
    %cst_14 = arith.constant 0.000000e+00 : f32
    %29 = vector.broadcast %cst_14 : f32 to vector<8x256xf32>
    %30 = arith.maximumf %28, %29 : vector<8x256xf32>
    %31 = arith.truncf %30 : vector<8x256xf32> to vector<8x256xbf16>
    %c0_15 = arith.constant 0 : index
    %c0_16 = arith.constant 0 : index
    %32 = vector.load %arg6[%c0_15, %c0_16] : memref<256x128xbf16, #tpu.memory_space<vmem>>, vector<256x128xbf16>
    %cst_17 = arith.constant dense<0.000000e+00> : vector<8x128xf32>
    %33 = tpu.matmul %31, %32, %cst_17 {dimension_numbers = #tpu.dot_dimension_numbers<[1], [0], [0], [1], [0, 0, 1, 1], [], []>} : vector<8x256xbf16>, vector<256x128xbf16>, vector<8x128xf32> -> vector<8x128xf32>
    %c0_18 = arith.constant 0 : index
    %c0_19 = arith.constant 0 : index
    %34 = vector.load %arg7[%c0_18, %c0_19] : memref<1x128xf32, #tpu.memory_space<vmem>>, vector<1x128xf32>
    %35 = vector.broadcast %34 : vector<1x128xf32> to vector<8x128xf32>
    %36 = arith.addf %33, %35 : vector<8x128xf32>
    %cst_20 = arith.constant dense<0.000000e+00> : vector<8xf32>
    %37 = vector.multi_reduction <add>, %36, %cst_20 [1] : vector<8x128xf32> to vector<8xf32>
    %38 = vector.shape_cast %37 : vector<8xf32> to vector<8x1xf32>
    %cst_21 = arith.constant 1.280000e+02 : f32
    %39 = vector.broadcast %cst_21 : f32 to vector<8x1xf32>
    %40 = arith.divf %38, %39 : vector<8x1xf32>
    %41 = vector.broadcast %40 : vector<8x1xf32> to vector<8x128xf32>
    %42 = arith.subf %36, %41 : vector<8x128xf32>
    %43 = arith.mulf %42, %42 : vector<8x128xf32>
    %cst_22 = arith.constant dense<0.000000e+00> : vector<8xf32>
    %44 = vector.multi_reduction <add>, %43, %cst_22 [1] : vector<8x128xf32> to vector<8xf32>
    %45 = vector.shape_cast %44 : vector<8xf32> to vector<8x1xf32>
    %cst_23 = arith.constant 1.280000e+02 : f32
    %46 = vector.broadcast %cst_23 : f32 to vector<8x1xf32>
    %47 = arith.divf %45, %46 : vector<8x1xf32>
    %c0_24 = arith.constant 0 : index
    %c0_25 = arith.constant 0 : index
    %48 = vector.load %arg8[%c0_24, %c0_25] : memref<1x128xf32, #tpu.memory_space<vmem>>, vector<1x128xf32>
    %cst_26 = arith.constant 9.99999974E-6 : f32
    %49 = vector.broadcast %cst_26 : f32 to vector<8x1xf32>
    %50 = arith.addf %47, %49 : vector<8x1xf32>
    %51 = math.rsqrt %50 : vector<8x1xf32>
    %52 = vector.broadcast %48 : vector<1x128xf32> to vector<8x128xf32>
    %53 = vector.broadcast %51 : vector<8x1xf32> to vector<8x128xf32>
    %54 = arith.mulf %52, %53 : vector<8x128xf32>
    %55 = arith.mulf %42, %54 : vector<8x128xf32>
    %c0_27 = arith.constant 0 : index
    %c0_28 = arith.constant 0 : index
    %56 = vector.load %arg9[%c0_27, %c0_28] : memref<1x128xf32, #tpu.memory_space<vmem>>, vector<1x128xf32>
    %57 = vector.broadcast %56 : vector<1x128xf32> to vector<8x128xf32>
    %58 = arith.addf %55, %57 : vector<8x128xf32>
    %cst_29 = arith.constant 0.000000e+00 : f32
    %59 = vector.broadcast %cst_29 : f32 to vector<8x128xf32>
    %60 = arith.maximumf %58, %59 : vector<8x128xf32>
    %61 = arith.truncf %60 : vector<8x128xf32> to vector<8x128xbf16>
    %c0_30 = arith.constant 0 : index
    %c0_31 = arith.constant 0 : index
    %62 = vector.load %arg10[%c0_30, %c0_31] : memref<128x8xbf16, #tpu.memory_space<vmem>>, vector<128x8xbf16>
    %cst_32 = arith.constant dense<0.000000e+00> : vector<8x8xf32>
    %63 = tpu.matmul %61, %62, %cst_32 {dimension_numbers = #tpu.dot_dimension_numbers<[1], [0], [0], [1], [0, 0, 1, 1], [], []>} : vector<8x128xbf16>, vector<128x8xbf16>, vector<8x8xf32> -> vector<8x8xf32>
    %c0_33 = arith.constant 0 : index
    %c0_34 = arith.constant 0 : index
    %64 = vector.load %arg11[%c0_33, %c0_34] : memref<1x8xf32, #tpu.memory_space<vmem>>, vector<1x8xf32>
    %65 = vector.broadcast %64 : vector<1x8xf32> to vector<8x8xf32>
    %66 = arith.addf %63, %65 : vector<8x8xf32>
    %c0_35 = arith.constant 0 : index
    %c0_36 = arith.constant 0 : index
    %67 = vector.load %arg12[%c0_35, %c0_36] : memref<8x8xf32, #tpu.memory_space<vmem>>, vector<8x8xf32>
    tpu.vector_store %arg12[%c0_35, %c0_36], %66 {strides = array<i32>} : memref<8x8xf32, #tpu.memory_space<vmem>>, vector<8x8xf32>,
    return
  }
  func.func @transform_0(%arg0: i32) -> (i32, i32) {
    %c0_i32 = arith.constant 0 : i32
    %c0_i32_0 = arith.constant 0 : i32
    return %arg0, %c0_i32 : i32, i32
  }
  func.func @transform_1(%arg0: i32) -> (i32, i32) {
    %c0_i32 = arith.constant 0 : i32
    %c0_i32_0 = arith.constant 0 : i32
    %c0_i32_1 = arith.constant 0 : i32
    return %c0_i32, %c0_i32_0 : i32, i32
  }
  func.func @transform_2(%arg0: i32) -> (i32, i32) {
    %c0_i32 = arith.constant 0 : i32
    %c0_i32_0 = arith.constant 0 : i32
    %c0_i32_1 = arith.constant 0 : i32
    return %c0_i32, %c0_i32_0 : i32, i32
  }
  func.func @transform_3(%arg0: i32) -> (i32, i32) {
    %c0_i32 = arith.constant 0 : i32
    %c0_i32_0 = arith.constant 0 : i32
    %c0_i32_1 = arith.constant 0 : i32
    return %c0_i32, %c0_i32_0 : i32, i32
  }
  func.func @transform_4(%arg0: i32) -> (i32, i32) {
    %c0_i32 = arith.constant 0 : i32
    %c0_i32_0 = arith.constant 0 : i32
    %c0_i32_1 = arith.constant 0 : i32
    return %c0_i32, %c0_i32_0 : i32, i32
  }
  func.func @transform_5(%arg0: i32) -> (i32, i32) {
    %c0_i32 = arith.constant 0 : i32
    %c0_i32_0 = arith.constant 0 : i32
    %c0_i32_1 = arith.constant 0 : i32
    return %c0_i32, %c0_i32_0 : i32, i32
  }
  func.func @transform_6(%arg0: i32) -> (i32, i32) {
    %c0_i32 = arith.constant 0 : i32
    %c0_i32_0 = arith.constant 0 : i32
    %c0_i32_1 = arith.constant 0 : i32
    return %c0_i32, %c0_i32_0 : i32, i32
  }
  func.func @transform_7(%arg0: i32) -> (i32, i32) {
    %c0_i32 = arith.constant 0 : i32
    %c0_i32_0 = arith.constant 0 : i32
    %c0_i32_1 = arith.constant 0 : i32
    return %c0_i32, %c0_i32_0 : i32, i32
  }
  func.func @transform_8(%arg0: i32) -> (i32, i32) {
    %c0_i32 = arith.constant 0 : i32
    %c0_i32_0 = arith.constant 0 : i32
    %c0_i32_1 = arith.constant 0 : i32
    return %c0_i32, %c0_i32_0 : i32, i32
  }
  func.func @transform_9(%arg0: i32) -> (i32, i32) {
    %c0_i32 = arith.constant 0 : i32
    %c0_i32_0 = arith.constant 0 : i32
    %c0_i32_1 = arith.constant 0 : i32
    return %c0_i32, %c0_i32_0 : i32, i32
  }
  func.func @transform_10(%arg0: i32) -> (i32, i32) {
    %c0_i32 = arith.constant 0 : i32
    %c0_i32_0 = arith.constant 0 : i32
    %c0_i32_1 = arith.constant 0 : i32
    return %c0_i32, %c0_i32_0 : i32, i32
  }
  func.func @transform_11(%arg0: i32) -> (i32, i32) {
    %c0_i32 = arith.constant 0 : i32
    %c0_i32_0 = arith.constant 0 : i32
    return %arg0, %c0_i32 : i32, i32
  }
}

</mosaic_0001>

<llo_original>
// kernel: tpu_custom_call.1
$region0: #{tpu_custom_call.1}
  #allocation0 [shape = 'u32[]', space=smem, size = 0x4, offset = 0x4, fixed_abs, tag = 'smem constant byte address 0x4 - core index']
  #allocation1 [shape = 'u32[144,128]{1,0:T(1,128)}', space=vmem, size = 0x12000, scoped, tag = 'internal scratch']
  %s0 = inlined_call_operand.vmem [shape: f32[8,32], index: 0, kind: input, shape index: {}]
  %s1 = inlined_call_operand.vmem [shape: bf16[32,256], index: 1, kind: input, shape index: {}]
  %s2 = inlined_call_operand.vmem [shape: f32[1,256], index: 2, kind: input, shape index: {}]
  %s3 = inlined_call_operand.vmem [shape: f32[1,256], index: 3, kind: input, shape index: {}]
  %s4 = inlined_call_operand.vmem [shape: f32[1,256], index: 4, kind: input, shape index: {}]
  %s5 = inlined_call_operand.hbm [shape: bf16[256,128], index: 5, kind: input, shape index: {}]
  %s6 = inlined_call_operand.vmem [shape: f32[1,128], index: 6, kind: input, shape index: {}]
  %s7 = inlined_call_operand.vmem [shape: f32[1,128], index: 7, kind: input, shape index: {}]
  %s8 = inlined_call_operand.vmem [shape: f32[1,128], index: 8, kind: input, shape index: {}]
  %s9 = inlined_call_operand.vmem [shape: bf16[128,8], index: 9, kind: input, shape index: {}]
  %s10 = inlined_call_operand.vmem [shape: f32[1,8], index: 10, kind: input, shape index: {}]
  %s11 = inlined_call_operand.hbm [shape: f32[8,8], index: 11, kind: output, shape index: {}]
  %s12 = sld [smem:[#allocation0]]
  $region58: #{tpu_custom_call.1} parent=0
    _
  %s14 = ssub.s32 1, %s12
  %s15 = scalar_select 0, %s14, %s12
  $region1: #{tpu_custom_call.1} parent=0
    #allocation2 [shape = 'u8[65536]{0}', space=vmem, size = 0x10000, scoped, tag = 'input window, operand 5, single buffered']
    #allocation3 [shape = 's32[1]{0}', space=sflag, size = 0x4, scoped, tag = 'scoped memory for tpu_custom_call.1']
    #allocation4 [shape = 's32[1]{0}', space=sflag, size = 0x4, scoped, tag = 'scoped memory for tpu_custom_call.1']
    #allocation5 [shape = 'u8[4096]{0}', space=vmem, size = 0x1000, scoped, tag = 'output window, operand 0, single buffered']
    %16 = vsyncpa [#allocation3], 0
    %17 = vsyncpa [#allocation4], 0
    // Predicated region
    $region2: #{tpu_custom_call.1} parent=1 // pred_check
      _
    $region3: #{tpu_custom_call.1} parent=1 // pred_check_branch
      %19 = sbr.rel (0) target = $region5
    $region4: #{tpu_custom_call.1} parent=1 // pred_region
      _
    $region5: #{tpu_custom_call.1} parent=1 // pred_fallthru
      _
    // Predicated region
    $region6: #{tpu_custom_call.1} parent=1 // pred_check
      _
    $region7: #{tpu_custom_call.1} parent=1 // pred_check_branch
      %21 = sbr.rel (0) target = $region9
    $region8: #{tpu_custom_call.1} parent=1 // pred_region
      _
    $region9: #{tpu_custom_call.1} parent=1 // pred_fallthru
      _
    // Predicated region
    $region10: #{tpu_custom_call.1} parent=1 // pred_check
      _
    $region11: #{tpu_custom_call.1} parent=1 // pred_check_branch
      %23 = sbr.rel (0) target = $region13
    $region12: #{tpu_custom_call.1} parent=1 // pred_region
      _
    $region13: #{tpu_custom_call.1} parent=1 // pred_fallthru
      _
    // Predicated region
    $region14: #{tpu_custom_call.1} parent=1 // pred_check
      _
    $region15: #{tpu_custom_call.1} parent=1 // pred_check_branch
      %25 = sbr.rel (0) target = $region17
    $region16: #{tpu_custom_call.1} parent=1 // pred_region
      _
    $region17: #{tpu_custom_call.1} parent=1 // pred_fallthru
      _
    // Predicated region
    $region18: #{tpu_custom_call.1} parent=1 // pred_check
      _
    $region19: #{tpu_custom_call.1} parent=1 // pred_check_branch
      %27 = sbr.rel (0) target = $region21
    $region20: #{tpu_custom_call.1} parent=1 // pred_region
      _
    $region21: #{tpu_custom_call.1} parent=1 // pred_fallthru
      _
    // Predicated region
    $region22: #{tpu_custom_call.1} parent=1 // pred_check
      _
    $region23: #{tpu_custom_call.1} parent=1 // pred_check_branch
      %29 = sbr.rel (0) target = $region25
    $region24: #{tpu_custom_call.1} parent=1 // pred_region
      %s31 = ssub.s32 2048, 2048
      %32 = vsyncadd [#allocation3], %s31
      %s33 = sshll.u32 [#allocation2], 4
      %s34 = int_to_ptr.vmem [resolvable:$true] %s33
      %39 = dma.hbm_to_vmem [thread:$0]  %s5, 2048, %s34, [#allocation3], 64, 64, 4
    $region25: #{tpu_custom_call.1} parent=1 // pred_fallthru
      _
    // Predicated region
    $region26: #{tpu_custom_call.1} parent=1 // pred_check
      _
    $region27: #{tpu_custom_call.1} parent=1 // pred_check_branch
      %41 = sbr.rel (0) target = $region29
    $region28: #{tpu_custom_call.1} parent=1 // pred_region
      _
    $region29: #{tpu_custom_call.1} parent=1 // pred_fallthru
      _
    // Predicated region
    $region30: #{tpu_custom_call.1} parent=1 // pred_check
      _
    $region31: #{tpu_custom_call.1} parent=1 // pred_check_branch
      %43 = sbr.rel (0) target = $region33
    $region32: #{tpu_custom_call.1} parent=1 // pred_region
      _
    $region33: #{tpu_custom_call.1} parent=1 // pred_fallthru
      _
    // Predicated region
    $region34: #{tpu_custom_call.1} parent=1 // pred_check
      _
    $region35: #{tpu_custom_call.1} parent=1 // pred_check_branch
      %45 = sbr.rel (0) target = $region37
    $region36: #{tpu_custom_call.1} parent=1 // pred_region
      _
    $region37: #{tpu_custom_call.1} parent=1 // pred_fallthru
      _
    // Predicated region
    $region38: #{tpu_custom_call.1} parent=1 // pred_check
      _
    $region39: #{tpu_custom_call.1} parent=1 // pred_check_branch
      %47 = sbr.rel (0) target = $region41
    $region40: #{tpu_custom_call.1} parent=1 // pred_region
      _
    $region41: #{tpu_custom_call.1} parent=1 // pred_fallthru
      _
    // Predicated region
    $region42: #{tpu_custom_call.1} parent=1 // pred_check
      _
    $region43: #{tpu_custom_call.1} parent=1 // pred_check_branch
      %49 = sbr.rel (0) target = $region45
    $region44: #{tpu_custom_call.1} parent=1 // pred_region
      _
    $region45: #{tpu_custom_call.1} parent=1 // pred_fallthru
      _
    // Predicated region
    $region46: #{tpu_custom_call.1} parent=1 // pred_check
      _
    $region47: #{tpu_custom_call.1} parent=1 // pred_check_branch
      %51 = sbr.rel (0) target = $region49
    $region48: #{tpu_custom_call.1} parent=1 // pred_region
      %52 = dma.done [#allocation3], 2048
    $region49: #{tpu_custom_call.1} parent=1 // pred_fallthru
      _
    %v54 = vld [vmem:[%s0] sm:$0xff]
    %v55 = vpack.c.bf16 %v54, %v54
    %v56 = vld [vmem:[%s1] sm:$0xff]
    %v57 = vld [vmem:[%s1 + $0x8] sm:$0xff]
    %v58 = vld [vmem:[%s1 + $0x10] sm:$0xff]
    %v59 = vld [vmem:[%s1 + $0x18] sm:$0xff]
    %v60 = vld [vmem:[%s2] sm:$0x3]
    %v62 = vlaneseq
    %v63 = vshrl.u32 %v62, 7
    %v64 = vsub.s32 0, %v63
    %v65 = vrot.slane %v60, %v64
    %v66 = vlaneseq
    %v67 = vshrl.u32 %v66, 7
    %v68 = vsub.s32 1, %v67
    %v69 = vrot.slane %v60, %v68
    %v76 = vunpack.c.l.b16 %v56
    %v77 = vunpack.c.h.b16 %v56
    %v78 = vunpack.c.l.b16 %v57
    %v79 = vunpack.c.h.b16 %v57
    %v80 = vunpack.c.l.b16 %v58
    %v81 = vunpack.c.h.b16 %v58
    %v82 = vunpack.c.l.b16 %v59
    %v83 = vunpack.c.h.b16 %v59
    %v84 = vpack.c.b16 %v78, %v76
    %v85 = vpack.c.b16 %v79, %v77
    %v86 = vpack.c.b16 %v82, %v80
    %v87 = vpack.c.b16 %v83, %v81
    %vm92 = vcmask 261120
    %v94 = vsel %vm92, %v55, 0
    %96 = vmatprep.subr.bf16.mxu0 0
    %97 = vmatpush1.bf16.msra.mxu0 0
    %98 = vmatprep.subr.bf16.mxu0 0
    %99 = vmatpush1.bf16.msra.mxu0 0
    %100 = vmatprep.subr.bf16.mxu0 0
    %101 = vmatpush1.bf16.msra.mxu0 0
    %102 = vmatprep.subr.bf16.mxu0 0
    %103 = vmatpush1.bf16.msra.mxu0 0
    %104 = vmatprep.subr.bf16.mxu0 0
    %105 = vmatpush1.bf16.msra.mxu0 0
    %106 = vmatprep.subr.bf16.mxu0 0
    %107 = vmatpush1.bf16.msra.mxu0 0
    %108 = vmatprep.subr.bf16.mxu0 %v87
    %109 = vmatpush1.bf16.msra.mxu0 %v86
    %110 = vmatprep.subr.bf16.mxu0 %v85
    %111 = vmatpush1.bf16.msra.mxu0 %v84
    %112 = vmatprep.subr.bf16.mxu0 0
    %113 = vmatpush2.bf16.msra.mxu0 0
    %114 = vmatprep.subr.bf16.mxu0 0
    %115 = vmatpush2.bf16.msra.mxu0 0
    %116 = vmatprep.subr.bf16.mxu0 0
    %117 = vmatpush2.bf16.msra.mxu0 0
    %118 = vmatprep.subr.bf16.mxu0 0
    %119 = vmatpush2.bf16.msra.mxu0 0
    %120 = vmatprep.subr.bf16.mxu0 0
    %121 = vmatpush2.bf16.msra.mxu0 0
    %122 = vmatprep.subr.bf16.mxu0 0
    %123 = vmatpush2.bf16.msra.mxu0 0
    %124 = vmatprep.subr.bf16.mxu0 0
    %125 = vmatpush2.bf16.msra.mxu0 0
    %126 = vmatprep.subr.bf16.mxu0 0
    %127 = vmatpush2.bf16.msra.mxu0 0
    %128 = vmatprep.mubr.bf16.mxu0 0
    %129 = vmatmul.mubr.bf16.gmra.mxu0 %v94
    %v130 = vpop.f32.mrf.mxu0
    %v131 = vadd.f32 %v65, %v130
    %v132 = vpop.f32.mrf.mxu0
    %v133 = vadd.f32 %v69, %v132
    %v134 = vpop.f32.mrf.mxu0
    %v135 = vpop.f32.mrf.mxu0
    %136 = vdwg.mxu0
    %v137 = vadd.f32 %v131, %v133
    %138 = vadd.xlane.f32.xlu0 %v137
    %v139 = vpop.xlane.xlu0 %138
    %v140 = vrcp.pop 256.0
    %v141 = vmul.f32 %v139, %v140
    %v142 = vsub.f32 %v131, %v141
    %v143 = vsub.f32 %v133, %v141
    %v144 = vmul.f32 %v142, %v142
    %v145 = vmul.f32 %v143, %v143
    %v146 = vadd.f32 %v144, %v145
    %147 = vadd.xlane.f32.xlu0 %v146
    %v148 = vpop.xlane.xlu0 %147
    %v149 = vmul.f32 %v148, %v140
    %v150 = vld [vmem:[%s3] sm:$0x3]
    %v151 = vadd.f32 %v149, 1e-05
    %v152 = vrsqrt.pop %v151
    %v154 = vlaneseq
    %v155 = vshrl.u32 %v154, 7
    %v156 = vsub.s32 0, %v155
    %v157 = vrot.slane %v150, %v156
    %v158 = vlaneseq
    %v159 = vshrl.u32 %v158, 7
    %v160 = vsub.s32 1, %v159
    %v161 = vrot.slane %v150, %v160
    %v164 = vmul.f32 %v157, %v152
    %v165 = vmul.f32 %v161, %v152
    %v166 = vmul.f32 %v142, %v164
    %v167 = vmul.f32 %v143, %v165
    %v168 = vld [vmem:[%s4] sm:$0x3]
    %v170 = vlaneseq
    %v171 = vshrl.u32 %v170, 7
    %v172 = vsub.s32 0, %v171
    %v173 = vrot.slane %v168, %v172
    %v174 = vlaneseq
    %v175 = vshrl.u32 %v174, 7
    %v176 = vsub.s32 1, %v175
    %v177 = vrot.slane %v168, %v176
    %v180 = vadd.f32 %v166, %v173
    %v181 = vadd.f32 %v167, %v177
    %v182 = vmax.f32 %v180, 0.0
    %v183 = vmax.f32 %v181, 0.0
    %v184 = vpack.c.bf16 %v182, %v182
    %v185 = vpack.c.bf16 %v183, %v183
    %v186 = vld [vmem:[#allocation2] sm:$0xf]
    %v187 = vld [vmem:[#allocation2 + $0x4] sm:$0xf]
    %v188 = vld [vmem:[#allocation2 + $0x8] sm:$0xf]
    %v189 = vld [vmem:[#allocation2 + $0xc] sm:$0xf]
    %v190 = vld [vmem:[#allocation2 + $0x10] sm:$0xf]
    %v191 = vld [vmem:[#allocation2 + $0x14] sm:$0xf]
    %v192 = vld [vmem:[#allocation2 + $0x18] sm:$0xf]
    %v193 = vld [vmem:[#allocation2 + $0x1c] sm:$0xf]
    %v194 = vld [vmem:[#allocation2 + $0x20] sm:$0xf]
    %v195 = vld [vmem:[#allocation2 + $0x24] sm:$0xf]
    %v196 = vld [vmem:[#allocation2 + $0x28] sm:$0xf]
    %v197 = vld [vmem:[#allocation2 + $0x2c] sm:$0xf]
    %v198 = vld [vmem:[#allocation2 + $0x30] sm:$0xf]
    %v199 = vld [vmem:[#allocation2 + $0x34] sm:$0xf]
    %v200 = vld [vmem:[#allocation2 + $0x38] sm:$0xf]
    %v201 = vld [vmem:[#allocation2 + $0x3c] sm:$0xf]
    %v202 = vld [vmem:[#allocation2 + $0x40] sm:$0xf]
    %v203 = vld [vmem:[#allocation2 + $0x44] sm:$0xf]
    %v204 = vld [vmem:[#allocation2 + $0x48] sm:$0xf]
    %v205 = vld [vmem:[#allocation2 + $0x4c] sm:$0xf]
    %v206 = vld [vmem:[#allocation2 + $0x50] sm:$0xf]
    %v207 = vld [vmem:[#allocation2 + $0x54] sm:$0xf]
    %v208 = vld [vmem:[#allocation2 + $0x58] sm:$0xf]
    %v209 = vld [vmem:[#allocation2 + $0x5c] sm:$0xf]
    %v210 = vld [vmem:[#allocation2 + $0x60] sm:$0xf]
    %v211 = vld [vmem:[#allocation2 + $0x64] sm:$0xf]
    %v212 = vld [vmem:[#allocation2 + $0x68] sm:$0xf]
    %v213 = vld [vmem:[#allocation2 + $0x6c] sm:$0xf]
    %v214 = vld [vmem:[#allocation2 + $0x70] sm:$0xf]
    %v215 = vld [vmem:[#allocation2 + $0x74] sm:$0xf]
    %v216 = vld [vmem:[#allocation2 + $0x78] sm:$0xf]
    %v217 = vld [vmem:[#allocation2 + $0x7c] sm:$0xf]
    %v218 = vld [vmem:[%s6] sm:$0x1]
    %v220 = vlaneseq
    %v221 = vshrl.u32 %v220, 7
    %v222 = vsub.s32 0, %v221
    %v223 = vrot.slane %v218, %v222
    %v257 = vunpack.c.l.b16 %v186
    %v258 = vunpack.c.l.b16 %v187
    %v259 = vunpack.c.l.b16 %v188
    %v260 = vunpack.c.l.b16 %v189
    %v261 = vunpack.c.l.b16 %v190
    %v262 = vunpack.c.l.b16 %v191
    %v263 = vunpack.c.l.b16 %v192
    %v264 = vunpack.c.l.b16 %v193
    %v265 = vunpack.c.l.b16 %v194
    %v266 = vunpack.c.l.b16 %v195
    %v267 = vunpack.c.l.b16 %v196
    %v268 = vunpack.c.l.b16 %v197
    %v269 = vunpack.c.l.b16 %v198
    %v270 = vunpack.c.l.b16 %v199
    %v271 = vunpack.c.l.b16 %v200
    %v272 = vunpack.c.l.b16 %v201
    %v273 = vunpack.c.l.b16 %v202
    %v274 = vunpack.c.l.b16 %v203
    %v275 = vunpack.c.l.b16 %v204
    %v276 = vunpack.c.l.b16 %v205
    %v277 = vunpack.c.l.b16 %v206
    %v278 = vunpack.c.l.b16 %v207
    %v279 = vunpack.c.l.b16 %v208
    %v280 = vunpack.c.l.b16 %v209
    %v281 = vunpack.c.l.b16 %v210
    %v282 = vunpack.c.l.b16 %v211
    %v283 = vunpack.c.l.b16 %v212
    %v284 = vunpack.c.l.b16 %v213
    %v285 = vunpack.c.l.b16 %v214
    %v286 = vunpack.c.l.b16 %v215
    %v287 = vunpack.c.l.b16 %v216
    %v288 = vunpack.c.l.b16 %v217
    %v289 = vpack.c.b16 %v258, %v257
    %v290 = vpack.c.b16 %v260, %v259
    %v291 = vpack.c.b16 %v262, %v261
    %v292 = vpack.c.b16 %v264, %v263
    %v293 = vpack.c.b16 %v266, %v265
    %v294 = vpack.c.b16 %v268, %v267
    %v295 = vpack.c.b16 %v270, %v269
    %v296 = vpack.c.b16 %v272, %v271
    %v297 = vpack.c.b16 %v274, %v273
    %v298 = vpack.c.b16 %v276, %v275
    %v299 = vpack.c.b16 %v278, %v277
    %v300 = vpack.c.b16 %v280, %v279
    %v301 = vpack.c.b16 %v282, %v281
    %v302 = vpack.c.b16 %v284, %v283
    %v303 = vpack.c.b16 %v286, %v285
    %v304 = vpack.c.b16 %v288, %v287
    %321 = vmatprep.subr.bf16.mxu0 0
    %322 = vmatpush1.bf16.msra.mxu0 %v296
    %323 = vmatprep.subr.bf16.mxu0 0
    %324 = vmatpush1.bf16.msra.mxu0 %v295
    %325 = vmatprep.subr.bf16.mxu0 0
    %326 = vmatpush1.bf16.msra.mxu0 %v294
    %327 = vmatprep.subr.bf16.mxu0 0
    %328 = vmatpush1.bf16.msra.mxu0 %v293
    %329 = vmatprep.subr.bf16.mxu0 0
    %330 = vmatpush1.bf16.msra.mxu0 %v292
    %331 = vmatprep.subr.bf16.mxu0 0
    %332 = vmatpush1.bf16.msra.mxu0 %v291
    %333 = vmatprep.subr.bf16.mxu0 0
    %334 = vmatpush1.bf16.msra.mxu0 %v290
    %335 = vmatprep.subr.bf16.mxu0 0
    %336 = vmatpush1.bf16.msra.mxu0 %v289
    %337 = vmatprep.subr.bf16.mxu0 0
    %338 = vmatpush2.bf16.msra.mxu0 %v304
    %339 = vmatprep.subr.bf16.mxu0 0
    %340 = vmatpush2.bf16.msra.mxu0 %v303
    %341 = vmatprep.subr.bf16.mxu0 0
    %342 = vmatpush2.bf16.msra.mxu0 %v302
    %343 = vmatprep.subr.bf16.mxu0 0
    %344 = vmatpush2.bf16.msra.mxu0 %v301
    %345 = vmatprep.subr.bf16.mxu0 0
    %346 = vmatpush2.bf16.msra.mxu0 %v300
    %347 = vmatprep.subr.bf16.mxu0 0
    %348 = vmatpush2.bf16.msra.mxu0 %v299
    %349 = vmatprep.subr.bf16.mxu0 0
    %350 = vmatpush2.bf16.msra.mxu0 %v298
    %351 = vmatprep.subr.bf16.mxu0 0
    %352 = vmatpush2.bf16.msra.mxu0 %v297
    %353 = vmatprep.mubr.bf16.mxu0 %v185
    %354 = vmatmul.mubr.bf16.gmra.mxu0 %v184
    %v355 = vpop.f32.mrf.mxu0
    %v356 = vadd.f32 %v223, %v355
    %v357 = vpop.f32.mrf.mxu0
    %v358 = vpop.f32.mrf.mxu0
    %v359 = vpop.f32.mrf.mxu0
    %360 = vdwg.mxu0
    %361 = vadd.xlane.f32.xlu0 %v356
    %v362 = vpop.xlane.xlu0 %361
    %v363 = vrcp.pop 128.0
    %v364 = vmul.f32 %v362, %v363
    %v365 = vsub.f32 %v356, %v364
    %v366 = vmul.f32 %v365, %v365
    %367 = vadd.xlane.f32.xlu0 %v366
    %v368 = vpop.xlane.xlu0 %367
    %v369 = vmul.f32 %v368, %v363
    %v370 = vld [vmem:[%s7] sm:$0x1]
    %v371 = vadd.f32 %v369, 1e-05
    %v372 = vrsqrt.pop %v371
    %v374 = vlaneseq
    %v375 = vshrl.u32 %v374, 7
    %v376 = vsub.s32 0, %v375
    %v377 = vrot.slane %v370, %v376
    %v379 = vmul.f32 %v377, %v372
    %v380 = vmul.f32 %v365, %v379
    %v381 = vld [vmem:[%s8] sm:$0x1]
    %v383 = vlaneseq
    %v384 = vshrl.u32 %v383, 7
    %v385 = vsub.s32 0, %v384
    %v386 = vrot.slane %v381, %v385
    %v388 = vadd.f32 %v380, %v386
    %v389 = vmax.f32 %v388, 0.0
    %v390 = vpack.c.bf16 %v389, %v389
    %v391 = vld [vmem:[%s9] sm:$0xf]
    %v392 = vld [vmem:[%s9 + $0x4] sm:$0xf]
    %v393 = vld [vmem:[%s9 + $0x8] sm:$0xf]
    %v394 = vld [vmem:[%s9 + $0xc] sm:$0xf]
    %v395 = vld [vmem:[%s9 + $0x10] sm:$0xf]
    %v396 = vld [vmem:[%s9 + $0x14] sm:$0xf]
    %v397 = vld [vmem:[%s9 + $0x18] sm:$0xf]
    %v398 = vld [vmem:[%s9 + $0x1c] sm:$0xf]
    %v399 = vld [vmem:[%s9 + $0x20] sm:$0xf]
    %v400 = vld [vmem:[%s9 + $0x24] sm:$0xf]
    %v401 = vld [vmem:[%s9 + $0x28] sm:$0xf]
    %v402 = vld [vmem:[%s9 + $0x2c] sm:$0xf]
    %v403 = vld [vmem:[%s9 + $0x30] sm:$0xf]
    %v404 = vld [vmem:[%s9 + $0x34] sm:$0xf]
    %v405 = vld [vmem:[%s9 + $0x38] sm:$0xf]
    %v406 = vld [vmem:[%s9 + $0x3c] sm:$0xf]
    %v407 = vld [vmem:[%s10] sm:$0x1]
    %v409 = vlaneseq
    %v410 = vshrl.u32 %v409, 7
    %v411 = vsub.s32 0, %v410
    %v412 = vrot.slane %v407, %v411
    %v430 = vunpack.c.l.b16 %v391
    %v431 = vunpack.c.l.b16 %v392
    %v432 = vunpack.c.l.b16 %v393
    %v433 = vunpack.c.l.b16 %v394
    %v434 = vunpack.c.l.b16 %v395
    %v435 = vunpack.c.l.b16 %v396
    %v436 = vunpack.c.l.b16 %v397
    %v437 = vunpack.c.l.b16 %v398
    %v438 = vunpack.c.l.b16 %v399
    %v439 = vunpack.c.l.b16 %v400
    %v440 = vunpack.c.l.b16 %v401
    %v441 = vunpack.c.l.b16 %v402
    %v442 = vunpack.c.l.b16 %v403
    %v443 = vunpack.c.l.b16 %v404
    %v444 = vunpack.c.l.b16 %v405
    %v445 = vunpack.c.l.b16 %v406
    %v446 = vpack.c.b16 %v431, %v430
    %v447 = vpack.c.b16 %v433, %v432
    %v448 = vpack.c.b16 %v435, %v434
    %v449 = vpack.c.b16 %v437, %v436
    %v450 = vpack.c.b16 %v439, %v438
    %v451 = vpack.c.b16 %v441, %v440
    %v452 = vpack.c.b16 %v443, %v442
    %v453 = vpack.c.b16 %v445, %v444
    %462 = vmatprep.subr.bf16.mxu0 0
    %463 = vmatpush1.bf16.msra.mxu0 %v453
    %464 = vmatprep.subr.bf16.mxu0 0
    %465 = vmatpush1.bf16.msra.mxu0 %v452
    %466 = vmatprep.subr.bf16.mxu0 0
    %467 = vmatpush1.bf16.msra.mxu0 %v451
    %468 = vmatprep.subr.bf16.mxu0 0
    %469 = vmatpush1.bf16.msra.mxu0 %v450
    %470 = vmatprep.subr.bf16.mxu0 0
    %471 = vmatpush1.bf16.msra.mxu0 %v449
    %472 = vmatprep.subr.bf16.mxu0 0
    %473 = vmatpush1.bf16.msra.mxu0 %v448
    %474 = vmatprep.subr.bf16.mxu0 0
    %475 = vmatpush1.bf16.msra.mxu0 %v447
    %476 = vmatprep.subr.bf16.mxu0 0
    %477 = vmatpush1.bf16.msra.mxu0 %v446
    %478 = vmatprep.subr.bf16.mxu0 0
    %479 = vmatpush2.bf16.msra.mxu0 0
    %480 = vmatprep.subr.bf16.mxu0 0
    %481 = vmatpush2.bf16.msra.mxu0 0
    %482 = vmatprep.subr.bf16.mxu0 0
    %483 = vmatpush2.bf16.msra.mxu0 0
    %484 = vmatprep.subr.bf16.mxu0 0
    %485 = vmatpush2.bf16.msra.mxu0 0
    %486 = vmatprep.subr.bf16.mxu0 0
    %487 = vmatpush2.bf16.msra.mxu0 0
    %488 = vmatprep.subr.bf16.mxu0 0
    %489 = vmatpush2.bf16.msra.mxu0 0
    %490 = vmatprep.subr.bf16.mxu0 0
    %491 = vmatpush2.bf16.msra.mxu0 0
    %492 = vmatprep.subr.bf16.mxu0 0
    %493 = vmatpush2.bf16.msra.mxu0 0
    %494 = vmatprep.mubr.bf16.mxu0 0
    %495 = vmatmul.mubr.bf16.gmra.mxu0 %v390
    %v496 = vpop.f32.mrf.mxu0
    %v497 = vadd.f32 %v412, %v496
    %v498 = vpop.f32.mrf.mxu0
    %v499 = vpop.f32.mrf.mxu0
    %v500 = vpop.f32.mrf.mxu0
    %501 = vdwg.mxu0
    %vm502 = vcmask 64512
    %503 = vst.msk [vmem:[#allocation5] sm:$0xff] %vm502, %v497
    // Predicated region
    $region50: #{tpu_custom_call.1} parent=1 // pred_check
      _
    $region51: #{tpu_custom_call.1} parent=1 // pred_check_branch
      %505 = sbr.rel (0) target = $region53
    $region52: #{tpu_custom_call.1} parent=1 // pred_region
      %s507 = ssub.s32 128, 128
      %508 = vsyncadd [#allocation4], %s507
      %s510 = sshll.u32 [#allocation5], 4
      %s511 = int_to_ptr.vmem [resolvable:$true] %s510
      %513 = dma.vmem_to_hbm [thread:$0]  %s511, 128, %s11, [#allocation4]
    $region53: #{tpu_custom_call.1} parent=1 // pred_fallthru
      _
    // Predicated region
    $region54: #{tpu_custom_call.1} parent=1 // pred_check
      _
    $region55: #{tpu_custom_call.1} parent=1 // pred_check_branch
      %515 = sbr.rel (0) target = $region57
    $region56: #{tpu_custom_call.1} parent=1 // pred_region
      %516 = dma.done [#allocation4], 128
    $region57: #{tpu_custom_call.1} parent=1 // pred_fallthru
      _
    %517 = vsyncpa [#allocation3], 1
    %518 = vsyncpa [#allocation4], 1

</llo_original>
